<compile_context>
chip_gen: v5e
topology: v5e:2x2
jax: 0.10.0
libtpu: 0.0.40
codegen_flags: <defaults>
</compile_context>

<pallas_src>
import jax
import jax.numpy as jnp
from jax.experimental import pallas as pl
from jax.experimental.pallas import tpu as pltpu

AA = "ARNDCQEGHILKMFPSTWYV"
AA_DICT = {aa: i + 1 for i, aa in enumerate(AA)}
VOCAB_SIZE = len(AA) + 1  # 21 (index 0 is the padding token)

_LANE = 128


def _round_up(x: int, m: int) -> int:
    return ((x + m - 1) // m) * m


def _onehot_kernel(idx_ref, out_ref):
    # idx_ref: (TILE_L, 1) int32 in VMEM; out_ref: (TILE_L, V_PAD) float in VMEM.
    idx = idx_ref[...]                                              # (TILE_L, 1)
    tl, vp = out_ref.shape
    cols = jax.lax.broadcasted_iota(jnp.int32, (tl, vp), 1)         # lane index
    out_ref[...] = (cols == idx).astype(out_ref.dtype)              # full-width vst


def onehot_pallas(codes: jnp.ndarray,
                  vocab_size: int = VOCAB_SIZE,
                  *,
                  tile_l: int = 1024,
                  out_dtype=jnp.float32) -> jnp.ndarray:
    """codes: int array of any shape (..., L) -> (..., L, vocab_size) one-hot.

    All leading dims are flattened into one gridded row axis so an entire batch
    of sequences is one pallas_call.
    """
    orig_shape = codes.shape
    flat = codes.reshape(-1).astype(jnp.int32)
    n = flat.shape[0]

    # Row tile: multiple of 8, no larger than needed for tiny inputs.
    tl = min(tile_l, _round_up(max(n, 1), 8))
    n_pad = _round_up(n, tl)
    # Tile-padding rows use -1 => all-zero one-hot rows (sliced off below anyway).
    flat = jnp.pad(flat, (0, n_pad - n), constant_values=-1)
    idx2d = flat.reshape(n_pad, 1)

    # Lane-dense output slab: pad vocab to 128 so stores are unmasked.
    v_pad = _round_up(vocab_size, _LANE)

    # VMEM budget: tl * v_pad * 4B * 2 buffers = 1 MiB at tl=1024 -> safe on
    # v5e/v6e (128 MiB) and v7x (64 MiB physical / 32 MiB default scoped).
    out = pl.pallas_call(
        _onehot_kernel,
        out_shape=jax.ShapeDtypeStruct((n_pad, v_pad), out_dtype),
        grid=(n_pad // tl,),
        in_specs=[pl.BlockSpec((tl, 1), lambda i: (i, 0))],
        out_specs=pl.BlockSpec((tl, v_pad), lambda i: (i, 0)),
        compiler_params=pltpu.CompilerParams(
            dimension_semantics=("parallel",)),
    )(idx2d)

    out = out[:n, :vocab_size]
    return out.reshape(*orig_shape, vocab_size)


def sequence_int_embed(seq: str, max_len=None) -> jnp.ndarray:
    """Host-side glue mirroring SequenceIntEmbeddingLayer.forward."""
    codes = [AA_DICT[aa] for aa in seq]
    if max_len is not None:
        codes = codes[:max_len]
        codes = codes + [0] * (max_len - len(codes))  # truncate_and_padd
    return jnp.asarray(codes, dtype=jnp.int32)


def sequence_onehot_embedding(seq: str, max_len=None) -> jnp.ndarray:
    """Mirrors SequenceOnehotEmbeddingLayer.forward for a single sequence."""
    int_enc = sequence_int_embed(seq, max_len=max_len)
    # TODO(synk): requires_grad_() has no Pallas/JAX equivalent; gradients in JAX
    # are handled by transformations, so the flag is intentionally ignored.
    return onehot_pallas(int_enc, VOCAB_SIZE)


def batched_sequence_onehot_embedding(seqs, max_len) -> jnp.ndarray:
    """Batch many sequences into ONE pallas_call: (B, max_len, vocab_size)."""
    codes = jnp.stack([sequence_int_embed(s, max_len=max_len) for s in seqs])
    return onehot_pallas(codes, VOCAB_SIZE)


# TODO(synk): if this one-hot feeds an embedding matmul (L,21)x(21,D), replace it
# with a row gather from the embedding table (jnp.take on the int codes) instead
# of materializing the dense one-hot; kept here because the module spec returns
# the explicit one-hot tensor.


if __name__ == "__main__":
    # Deterministic "random" amino-acid sequences: batch=2, length 8, padded to 16.
    key = jax.random.PRNGKey(0)
    batch, seq_len, max_len = 2, 8, 16
    letter_ids = jax.random.randint(key, (batch, seq_len), 0, len(AA))
    seqs = ["".join(AA[int(i)] for i in row) for row in letter_ids]

    # Batched path: one pallas_call for the whole batch.
    out_batched = batched_sequence_onehot_embedding(seqs, max_len=max_len)
    out_batched = jax.block_until_ready(out_batched)

    # Single-sequence path (module-faithful forward).
    out_single = jax.block_until_ready(
        sequence_onehot_embedding(seqs[0], max_len=max_len))

    # Reference check against plain-JAX one_hot of the same integer encodings.
    int_enc = jnp.stack([sequence_int_embed(s, max_len=max_len) for s in seqs])
    ref = jax.nn.one_hot(int_enc, VOCAB_SIZE, dtype=jnp.float32)

    assert out_batched.shape == (batch, max_len, VOCAB_SIZE), out_batched.shape
    assert out_batched.dtype == jnp.float32, out_batched.dtype
    assert out_single.shape == (max_len, VOCAB_SIZE), out_single.shape
    assert bool(jnp.all(out_batched == ref)), "batched mismatch vs reference one-hot"
    assert bool(jnp.all(out_single == ref[0])), "single mismatch vs reference one-hot"

    print("KERNEL_OK")
</pallas_src>

<mosaic_0001>
module attributes {stable_mosaic.version = 11 : i64} {
  func.func @_onehot_kernel(%arg0: i32, %arg1: memref<32x1xi32, #tpu.memory_space<vmem>>, %arg2: memref<32x128xf32, #tpu.memory_space<vmem>>) attributes {dimension_semantics = [#tpu.dimension_semantics<parallel>], iteration_bounds = array<i64: 1>, scalar_prefetch = 0 : i64, scratch_operands = 0 : i64, tpu.core_type = #tpu.core_type<tc>, window_params = [{transform_indices = @transform_0, window_bounds = array<i64: 32, 1>}, {transform_indices = @transform_1, window_bounds = array<i64: 32, 128>}]} {
    %c0 = arith.constant 0 : index
    %c0_0 = arith.constant 0 : index
    %0 = vector.load %arg1[%c0, %c0_0] : memref<32x1xi32, #tpu.memory_space<vmem>>, vector<32x1xi32>
    %1 = tpu.iota {dimensions = array<i32: 1>} : vector<32x128xi32>
    %2 = vector.broadcast %0 : vector<32x1xi32> to vector<32x128xi32>
    %3 = arith.cmpi eq, %1, %2 : vector<32x128xi32>
    %4 = arith.extui %3 : vector<32x128xi1> to vector<32x128xi32>
    %5 = arith.sitofp %4 : vector<32x128xi32> to vector<32x128xf32>
    %c0_1 = arith.constant 0 : index
    %c0_2 = arith.constant 0 : index
    %6 = vector.load %arg2[%c0_1, %c0_2] : memref<32x128xf32, #tpu.memory_space<vmem>>, vector<32x128xf32>
    tpu.vector_store %arg2[%c0_1, %c0_2], %5 {strides = array<i32>} : memref<32x128xf32, #tpu.memory_space<vmem>>, vector<32x128xf32>,
    return
  }
  func.func @transform_0(%arg0: i32) -> (i32, i32) {
    %c0_i32 = arith.constant 0 : i32
    %c0_i32_0 = arith.constant 0 : i32
    return %arg0, %c0_i32 : i32, i32
  }
  func.func @transform_1(%arg0: i32) -> (i32, i32) {
    %c0_i32 = arith.constant 0 : i32
    %c0_i32_0 = arith.constant 0 : i32
    return %arg0, %c0_i32 : i32, i32
  }
}

</mosaic_0001>

<llo_original>
// kernel: tpu_custom_call.1
$region0: #{tpu_custom_call.1}
  #allocation0 [shape = 'u32[]', space=smem, size = 0x4, offset = 0x4, fixed_abs, tag = 'smem constant byte address 0x4 - core index']
  #allocation1 [shape = 'u32[72,128]{1,0:T(1,128)}', space=vmem, size = 0x9000, scoped, tag = 'internal scratch']
  %s0 = inlined_call_operand.vmem [shape: s32[32,1], index: 0, kind: input, shape index: {}]
  %s1 = inlined_call_operand.hbm [shape: f32[32,128], index: 1, kind: output, shape index: {}]
  %s2 = sld [smem:[#allocation0]]
  $region14: #{tpu_custom_call.1} parent=0
    _
  %s4 = ssub.s32 1, %s2
  %s5 = scalar_select 0, %s4, %s2
  $region1: #{tpu_custom_call.1} parent=0
    #allocation2 [shape = 'u8[16384]{0}', space=vmem, size = 0x4000, scoped, tag = 'output window, operand 0, single buffered']
    #allocation3 [shape = 's32[1]{0}', space=sflag, size = 0x4, scoped, tag = 'scoped memory for tpu_custom_call.1']
    %6 = vsyncpa [#allocation3], 0
    // Predicated region
    $region2: #{tpu_custom_call.1} parent=1 // pred_check
      _
    $region3: #{tpu_custom_call.1} parent=1 // pred_check_branch
      %8 = sbr.rel (0) target = $region5
    $region4: #{tpu_custom_call.1} parent=1 // pred_region
      _
    $region5: #{tpu_custom_call.1} parent=1 // pred_fallthru
      _
    %v9 = vld [vmem:[%s0] sm:$0xff]
    %v10 = vld [vmem:[%s0 + $0x8] sm:$0xff]
    %v11 = vld [vmem:[%s0 + $0x10] sm:$0xff]
    %v12 = vld [vmem:[%s0 + $0x18] sm:$0xff]
    %v13 = vlaneseq
    %v14 = vand.u32 %v13, 127
    %15 = vset.pattern.permute.xlu0 0
    %16 = vperm.xlu0 %15, %v9
    %v17 = vpop.permute.xlu0 %16
    %18 = vset.pattern.permute.xlu0 0
    %19 = vperm.xlu0 %18, %v10
    %v20 = vpop.permute.xlu0 %19
    %21 = vset.pattern.permute.xlu0 0
    %22 = vperm.xlu0 %21, %v11
    %v23 = vpop.permute.xlu0 %22
    %24 = vset.pattern.permute.xlu0 0
    %25 = vperm.xlu0 %24, %v12
    %v26 = vpop.permute.xlu0 %25
    %vm27 = vcmp.eq.s32.totalorder %v14, %v17
    %vm28 = vcmp.eq.s32.totalorder %v14, %v20
    %vm29 = vcmp.eq.s32.totalorder %v14, %v23
    %vm30 = vcmp.eq.s32.totalorder %v14, %v26
    %v31 = vsel %vm27, 1, 0
    %v32 = vsel %vm28, 1, 0
    %v33 = vsel %vm29, 1, 0
    %v34 = vsel %vm30, 1, 0
    %v35 = vcvt.s32.f32 %v31
    %v36 = vcvt.s32.f32 %v32
    %v37 = vcvt.s32.f32 %v33
    %v38 = vcvt.s32.f32 %v34
    %39 = vst [vmem:[#allocation2] sm:$0xff] %v35
    %40 = vst [vmem:[#allocation2 + $0x8] sm:$0xff] %v36
    %41 = vst [vmem:[#allocation2 + $0x10] sm:$0xff] %v37
    %42 = vst [vmem:[#allocation2 + $0x18] sm:$0xff] %v38
    // Predicated region
    $region6: #{tpu_custom_call.1} parent=1 // pred_check
      _
    $region7: #{tpu_custom_call.1} parent=1 // pred_check_branch
      %44 = sbr.rel (0) target = $region9
    $region8: #{tpu_custom_call.1} parent=1 // pred_region
      %46 = vsyncadd [#allocation3], 0
      %s47 = sshll.u32 [#allocation2], 4
      %s48 = int_to_ptr.vmem [resolvable:$true] %s47
      %s49 = sshll.u32 %s1, 4
      %s50 = int_to_ptr.hbm [resolvable:$true] %s49
      %55 = dma.vmem_to_hbm [thread:$0]  %s48, 512, %s50, [#allocation3], 128, 128, 8
    $region9: #{tpu_custom_call.1} parent=1 // pred_fallthru
      _
    // Predicated region
    $region10: #{tpu_custom_call.1} parent=1 // pred_check
      _
    $region11: #{tpu_custom_call.1} parent=1 // pred_check_branch
      %57 = sbr.rel (0) target = $region13
    $region12: #{tpu_custom_call.1} parent=1 // pred_region
      %59 = dma.done [#allocation3], 512
    $region13: #{tpu_custom_call.1} parent=1 // pred_fallthru
      _
    %60 = vsyncpa [#allocation3], 1

</llo_original>
